<compile_context>
chip_gen: v7x
topology: tpu7x:2x2x1
jax: 0.10.0
libtpu: 0.0.40
codegen_flags: <defaults>
</compile_context>

<pallas_src>
import jax
import jax.numpy as jnp
from jax.experimental import pallas as pl
from jax.experimental.pallas import tpu as pltpu


def _round_up(v, m):
    return (v + m - 1) // m * m


def _global_pool_mlp_kernel(offsets_ref, glo_ref, ghi_ref,        # scalar prefetch (SMEM)
                            x_ref, w1_ref, b1_ref, w2_ref, b2_ref,  # inputs
                            o_ref,                                  # output
                            pooled_ref):                            # VMEM scratch
    """One grid step = one tile of TN node rows; pooled_ref is the running segment max."""
    neg = jnp.finfo(jnp.float32).min      # finite sentinel (matches reference; padded /
                                          # empty graph rows stay finite through the MLP)
    pid = pl.program_id(0)
    last = pl.num_programs(0) - 1
    tn = x_ref.shape[0]

    @pl.when(pid == 0)
    def _init():
        pooled_ref[...] = jnp.full_like(pooled_ref, neg)

    # ---- segment max over this node tile, looping only over graphs it touches ----
    x = x_ref[...]                                                   # [TN, H] f32
    rows = jax.lax.broadcasted_iota(jnp.int32, (tn, 1), 0)           # [TN, 1]
    tile_start = pid * tn
    g_lo = glo_ref[pid]
    g_hi = ghi_ref[pid]

    def pool_one_graph(g, _):
        lo = offsets_ref[g] - tile_start                             # scalar int32
        hi = offsets_ref[g + 1] - tile_start
        mask = (rows >= lo) & (rows < hi)                            # [TN, 1] bool
        gmax = jnp.max(jnp.where(mask, x, neg), axis=0, keepdims=True)   # [1, H]
        cur = pooled_ref[pl.ds(g, 1), :]
        pooled_ref[pl.ds(g, 1), :] = jnp.maximum(cur, gmax)
        return None

    jax.lax.fori_loop(g_lo, g_hi, pool_one_graph, None)

    # ---- on the last tile: fc1 + ReLU, fc2 + ReLU ----
    @pl.when(pid == last)
    def _mlp():
        pooled = pooled_ref[...]                                     # [B_pad, H]
        h1 = jnp.dot(pooled, w1_ref[...],
                     preferred_element_type=jnp.float32) + b1_ref[...]
        h1 = jnp.maximum(h1, 0.0)
        # TODO(synk): F.dropout in training mode not implemented (eval-mode identity;
        # dropout_rate is not even defined in the module's __init__).
        h2 = jnp.dot(h1, w2_ref[...],
                     preferred_element_type=jnp.float32) + b2_ref[...]
        o_ref[...] = jnp.maximum(h2, 0.0)


def global_pooling_embedder(x, batch, w1, b1, w2, b2, num_graphs, *,
                            tile_n=512, sorted_batch=True):
    """x: [N, H] f32 node features; batch: [N] int32 graph ids (sorted ascending,
    standard PyG Batch layout; pass sorted_batch=False to sort here).
    w1: [H, F1], b1: [F1], w2: [F1, F2], b2: [F2]  (weights in [in, out] layout)."""
    batch = batch.astype(jnp.int32)
    if not sorted_batch:
        order = jnp.argsort(batch)
        x = x[order]
        batch = batch[order]

    n, h = x.shape
    f1 = w1.shape[1]
    f2 = w2.shape[1]

    # Lane/sublane-dense padded dims for the tiny MLP / output only (x stays unpadded).
    f1_pad = _round_up(f1, 128)
    f2_pad = _round_up(f2, 128)
    b_pad = _round_up(num_graphs, 8)

    # Node-dim tiling; last tile may be ragged (handled by the in-kernel row masks).
    tn = min(tile_n, _round_up(n, 8))
    n_tiles = pl.cdiv(n, tn)

    # Per-graph node offsets (graph g occupies rows [offsets[g], offsets[g+1])) and,
    # per node tile, the half-open range of graph ids that intersect that tile.
    offsets = jnp.searchsorted(
        batch, jnp.arange(num_graphs + 1, dtype=jnp.int32), side="left"
    ).astype(jnp.int32)
    tile_starts = jnp.arange(n_tiles, dtype=jnp.int32) * tn
    tile_last = jnp.minimum(tile_starts + tn, n) - 1
    g_lo = batch[tile_starts]                                        # [n_tiles]
    g_hi = batch[tile_last] + 1                                      # [n_tiles]

    # Pad the MLP weights/biases to lane-dense output dims (zero pad -> exact result).
    w1p = jnp.zeros((h, f1_pad), jnp.float32).at[:, :f1].set(w1)
    b1p = jnp.zeros((1, f1_pad), jnp.float32).at[0, :f1].set(b1)
    w2p = jnp.zeros((f1_pad, f2_pad), jnp.float32).at[:f1, :f2].set(w2)
    b2p = jnp.zeros((1, f2_pad), jnp.float32).at[0, :f2].set(b2)

    flops = (3 * n * h                                   # pooling select + max (approx)
             + 2 * b_pad * h * f1_pad + 2 * b_pad * f1_pad * f2_pad)
    bytes_accessed = 4 * (n * h + w1p.size + b1p.size + w2p.size + b2p.size
                          + b_pad * f2_pad) + 4 * (offsets.size + 2 * n_tiles)

    out = pl.pallas_call(
        _global_pool_mlp_kernel,
        out_shape=jax.ShapeDtypeStruct((b_pad, f2_pad), jnp.float32),
        grid_spec=pltpu.PrefetchScalarGridSpec(
            num_scalar_prefetch=3,                       # offsets, g_lo, g_hi -> SMEM
            grid=(n_tiles,),
            in_specs=[
                pl.BlockSpec((tn, h), lambda i, *_: (i, 0)),           # x tile (unpadded H)
                pl.BlockSpec((h, f1_pad), lambda i, *_: (0, 0)),       # w1 (resident)
                pl.BlockSpec((1, f1_pad), lambda i, *_: (0, 0)),       # b1 (resident)
                pl.BlockSpec((f1_pad, f2_pad), lambda i, *_: (0, 0)),  # w2 (resident)
                pl.BlockSpec((1, f2_pad), lambda i, *_: (0, 0)),       # b2 (resident)
            ],
            out_specs=pl.BlockSpec((b_pad, f2_pad), lambda i, *_: (0, 0)),
            scratch_shapes=[pltpu.VMEM((b_pad, h), jnp.float32)],      # running segment max
        ),
        compiler_params=pltpu.CompilerParams(
            dimension_semantics=("arbitrary",),          # reduction over node tiles
            vmem_limit_bytes=32 * 1024 * 1024,           # safe on v7x's 64 MiB physical VMEM
        ),
        cost_estimate=pl.CostEstimate(
            flops=flops, transcendentals=0, bytes_accessed=bytes_accessed),
    )(offsets, g_lo.astype(jnp.int32), g_hi.astype(jnp.int32),
      x.astype(jnp.float32), w1p, b1p, w2p, b2p)

    # Slice off graph / feature padding.
    return out[:num_graphs, :f2]


def _reference(x, batch, w1, b1, w2, b2, num_graphs):
    neg = jnp.finfo(jnp.float32).min
    mask = batch[:, None] == jnp.arange(num_graphs)[None, :]          # [N, B]
    masked = jnp.where(mask.T[:, :, None], x[None, :, :], neg)        # [B, N, H]
    pooled = masked.max(axis=1)                                       # [B, H]
    h1 = jnp.maximum(jnp.dot(pooled, w1, precision="highest") + b1, 0.0)
    return jnp.maximum(jnp.dot(h1, w2, precision="highest") + b2, 0.0)


if __name__ == "__main__":
    # Synthetic sizes: compound_embedder.out_features h = 32, out_features = 64
    #   -> fc1: 32 -> 16, fc2: 16 -> 32
    N_NODES, H = 8, 32
    OUT_FEATURES = 64
    F1, F2 = OUT_FEATURES // 4, OUT_FEATURES // 2
    NUM_GRAPHS = 2

    key = jax.random.PRNGKey(0)
    kx, kw1, kb1, kw2, kb2 = jax.random.split(key, 5)

    x = jax.random.normal(kx, (N_NODES, H), dtype=jnp.float32)
    batch = jnp.array([0, 0, 0, 0, 1, 1, 1, 1], dtype=jnp.int32)      # node -> graph id (sorted)

    # Deterministic parameter init (PyTorch Linear weight [out, in] -> stored as [in, out]).
    w1 = jax.random.normal(kw1, (H, F1), dtype=jnp.float32) * 0.1
    b1 = jax.random.normal(kb1, (F1,), dtype=jnp.float32) * 0.1
    w2 = jax.random.normal(kw2, (F1, F2), dtype=jnp.float32) * 0.1
    b2 = jax.random.normal(kb2, (F2,), dtype=jnp.float32) * 0.1

    out = global_pooling_embedder(x, batch, w1, b1, w2, b2, NUM_GRAPHS)
    out = jax.block_until_ready(out)

    ref = _reference(x, batch, w1, b1, w2, b2, NUM_GRAPHS)
    assert out.shape == (NUM_GRAPHS, F2), out.shape
    assert jnp.allclose(out, ref, atol=1e-4, rtol=1e-4), (out, ref)

    print("KERNEL_OK")
</pallas_src>

<mosaic_0001>
module attributes {stable_mosaic.version = 11 : i64} {
  func.func @_global_pool_mlp_kernel(%arg0: i32, %arg1: memref<3xi32, #tpu.memory_space<smem>>, %arg2: memref<1xi32, #tpu.memory_space<smem>>, %arg3: memref<1xi32, #tpu.memory_space<smem>>, %arg4: memref<8x32xf32, #tpu.memory_space<vmem>>, %arg5: memref<32x128xf32, #tpu.memory_space<vmem>>, %arg6: memref<1x128xf32, #tpu.memory_space<vmem>>, %arg7: memref<128x128xf32, #tpu.memory_space<vmem>>, %arg8: memref<1x128xf32, #tpu.memory_space<vmem>>, %arg9: memref<8x128xf32, #tpu.memory_space<vmem>>, %arg10: memref<8x32xf32, #tpu.memory_space<vmem>>) attributes {dimension_semantics = [#tpu.dimension_semantics<arbitrary>], iteration_bounds = array<i64: 1>, scalar_prefetch = 3 : i64, scratch_operands = 1 : i64, tpu.core_type = #tpu.core_type<tc>, window_params = [{transform_indices = @transform_0, window_bounds = array<i64: 8, 32>}, {pipeline_mode = #tpu.pipeline_mode<synchronous>, transform_indices = @transform_1, window_bounds = array<i64: 32, 128>}, {pipeline_mode = #tpu.pipeline_mode<synchronous>, transform_indices = @transform_2, window_bounds = array<i64: 1, 128>}, {pipeline_mode = #tpu.pipeline_mode<synchronous>, transform_indices = @transform_3, window_bounds = array<i64: 128, 128>}, {pipeline_mode = #tpu.pipeline_mode<synchronous>, transform_indices = @transform_4, window_bounds = array<i64: 1, 128>}, {pipeline_mode = #tpu.pipeline_mode<synchronous>, transform_indices = @transform_5, window_bounds = array<i64: 8, 128>}]} {
    %c0_i32 = arith.constant 0 : i32
    %0 = arith.cmpi eq, %arg0, %c0_i32 : i32
    %1 = arith.extui %0 : i1 to i32
    %c0_i32_0 = arith.constant 0 : i32
    %2 = arith.cmpi ne, %1, %c0_i32_0 : i32
    scf.if %2 {
      %cst = arith.constant -3.40282347E+38 : f32
      %15 = vector.broadcast %cst : f32 to vector<8x32xf32>
      %c0_4 = arith.constant 0 : index
      %c0_5 = arith.constant 0 : index
      %16 = vector.load %arg10[%c0_4, %c0_5] : memref<8x32xf32, #tpu.memory_space<vmem>>, vector<8x32xf32>
      tpu.vector_store %arg10[%c0_4, %c0_5], %15 {strides = array<i32>} : memref<8x32xf32, #tpu.memory_space<vmem>>, vector<8x32xf32>,
    } else {
    }
    %c0 = arith.constant 0 : index
    %c0_1 = arith.constant 0 : index
    %3 = vector.load %arg4[%c0, %c0_1] : memref<8x32xf32, #tpu.memory_space<vmem>>, vector<8x32xf32>
    %4 = tpu.iota {dimensions = array<i32: 0>} : vector<8x1xi32>
    %c8_i32 = arith.constant 8 : i32
    %5 = arith.muli %arg0, %c8_i32 : i32
    %6 = arith.index_cast %arg0 : i32 to index
    %7 = memref.load %arg2[%6] : memref<1xi32, #tpu.memory_space<smem>>
    %8 = arith.index_cast %arg0 : i32 to index
    %9 = memref.load %arg3[%8] : memref<1xi32, #tpu.memory_space<smem>>
    %10 = arith.subi %9, %7 : i32
    %11 = arith.addi %7, %10 : i32
    %c1_i32 = arith.constant 1 : i32
    scf.for %arg11 = %7 to %11 step %c1_i32  : i32 {
      %15 = arith.index_cast %arg11 : i32 to index
      %16 = memref.load %arg1[%15] : memref<3xi32, #tpu.memory_space<smem>>
      %17 = arith.subi %16, %5 : i32
      %c1_i32_4 = arith.constant 1 : i32
      %18 = arith.addi %arg11, %c1_i32_4 : i32
      %19 = arith.index_cast %18 : i32 to index
      %20 = memref.load %arg1[%19] : memref<3xi32, #tpu.memory_space<smem>>
      %21 = arith.subi %20, %5 : i32
      %22 = vector.broadcast %17 : i32 to vector<8x1xi32>
      %23 = arith.cmpi sge, %4, %22 : vector<8x1xi32>
      %24 = vector.broadcast %21 : i32 to vector<8x1xi32>
      %25 = arith.cmpi slt, %4, %24 : vector<8x1xi32>
      %26 = arith.andi %23, %25 : vector<8x1xi1>
      %cst = arith.constant -3.40282347E+38 : f32
      %27 = vector.shape_cast %26 : vector<8x1xi1> to vector<8x1xi1>
      %28 = vector.broadcast %27 : vector<8x1xi1> to vector<8x32xi1>
      %29 = vector.broadcast %cst : f32 to vector<8x32xf32>
      %30 = arith.select %28, %3, %29 : vector<8x32xi1>, vector<8x32xf32>
      %cst_5 = arith.constant dense<0xFF800000> : vector<32xf32>
      %31 = vector.multi_reduction <maximumf>, %30, %cst_5 [0] : vector<8x32xf32> to vector<32xf32>
      %32 = vector.shape_cast %31 : vector<32xf32> to vector<1x32xf32>
      %33 = arith.index_cast %arg11 : i32 to index
      %c0_6 = arith.constant 0 : index
      %34 = vector.load %arg10[%33, %c0_6] : memref<8x32xf32, #tpu.memory_space<vmem>>, vector<1x32xf32>
      %35 = arith.maximumf %34, %32 : vector<1x32xf32>
      %36 = arith.index_cast %arg11 : i32 to index
      %c0_7 = arith.constant 0 : index
      %37 = vector.load %arg10[%36, %c0_7] : memref<8x32xf32, #tpu.memory_space<vmem>>, vector<1x32xf32>
      tpu.vector_store %arg10[%36, %c0_7], %35 {strides = array<i32>} : memref<8x32xf32, #tpu.memory_space<vmem>>, vector<1x32xf32>,
    }
    %c0_i32_2 = arith.constant 0 : i32
    %12 = arith.cmpi eq, %arg0, %c0_i32_2 : i32
    %13 = arith.extui %12 : i1 to i32
    %c0_i32_3 = arith.constant 0 : i32
    %14 = arith.cmpi ne, %13, %c0_i32_3 : i32
    scf.if %14 {
      %c0_4 = arith.constant 0 : index
      %c0_5 = arith.constant 0 : index
      %15 = vector.load %arg10[%c0_4, %c0_5] : memref<8x32xf32, #tpu.memory_space<vmem>>, vector<8x32xf32>
      %c0_6 = arith.constant 0 : index
      %c0_7 = arith.constant 0 : index
      %16 = vector.load %arg5[%c0_6, %c0_7] : memref<32x128xf32, #tpu.memory_space<vmem>>, vector<32x128xf32>
      %cst = arith.constant dense<0.000000e+00> : vector<8x128xf32>
      %17 = tpu.matmul %15, %16, %cst {dimension_numbers = #tpu.dot_dimension_numbers<[1], [0], [0], [1], [0, 0, 1, 1], [], []>} : vector<8x32xf32>, vector<32x128xf32>, vector<8x128xf32> -> vector<8x128xf32>
      %c0_8 = arith.constant 0 : index
      %c0_9 = arith.constant 0 : index
      %18 = vector.load %arg6[%c0_8, %c0_9] : memref<1x128xf32, #tpu.memory_space<vmem>>, vector<1x128xf32>
      %19 = vector.broadcast %18 : vector<1x128xf32> to vector<8x128xf32>
      %20 = arith.addf %17, %19 : vector<8x128xf32>
      %cst_10 = arith.constant 0.000000e+00 : f32
      %21 = vector.broadcast %cst_10 : f32 to vector<8x128xf32>
      %22 = arith.maximumf %20, %21 : vector<8x128xf32>
      %c0_11 = arith.constant 0 : index
      %c0_12 = arith.constant 0 : index
      %23 = vector.load %arg7[%c0_11, %c0_12] : memref<128x128xf32, #tpu.memory_space<vmem>>, vector<128x128xf32>
      %cst_13 = arith.constant dense<0.000000e+00> : vector<8x128xf32>
      %24 = tpu.matmul %22, %23, %cst_13 {dimension_numbers = #tpu.dot_dimension_numbers<[1], [0], [0], [1], [0, 0, 1, 1], [], []>} : vector<8x128xf32>, vector<128x128xf32>, vector<8x128xf32> -> vector<8x128xf32>
      %c0_14 = arith.constant 0 : index
      %c0_15 = arith.constant 0 : index
      %25 = vector.load %arg8[%c0_14, %c0_15] : memref<1x128xf32, #tpu.memory_space<vmem>>, vector<1x128xf32>
      %26 = vector.broadcast %25 : vector<1x128xf32> to vector<8x128xf32>
      %27 = arith.addf %24, %26 : vector<8x128xf32>
      %cst_16 = arith.constant 0.000000e+00 : f32
      %28 = vector.broadcast %cst_16 : f32 to vector<8x128xf32>
      %29 = arith.maximumf %27, %28 : vector<8x128xf32>
      %c0_17 = arith.constant 0 : index
      %c0_18 = arith.constant 0 : index
      %30 = vector.load %arg9[%c0_17, %c0_18] : memref<8x128xf32, #tpu.memory_space<vmem>>, vector<8x128xf32>
      tpu.vector_store %arg9[%c0_17, %c0_18], %29 {strides = array<i32>} : memref<8x128xf32, #tpu.memory_space<vmem>>, vector<8x128xf32>,
    } else {
    }
    return
  }
  func.func @transform_0(%arg0: i32, %arg1: memref<3xi32, #tpu.memory_space<smem>>, %arg2: memref<1xi32, #tpu.memory_space<smem>>, %arg3: memref<1xi32, #tpu.memory_space<smem>>) -> (i32, i32) {
    %c0_i32 = arith.constant 0 : i32
    %c0_i32_0 = arith.constant 0 : i32
    return %arg0, %c0_i32 : i32, i32
  }
  func.func @transform_1(%arg0: i32, %arg1: memref<3xi32, #tpu.memory_space<smem>>, %arg2: memref<1xi32, #tpu.memory_space<smem>>, %arg3: memref<1xi32, #tpu.memory_space<smem>>) -> (i32, i32) {
    %c0_i32 = arith.constant 0 : i32
    %c0_i32_0 = arith.constant 0 : i32
    %c0_i32_1 = arith.constant 0 : i32
    return %c0_i32, %c0_i32_0 : i32, i32
  }
  func.func @transform_2(%arg0: i32, %arg1: memref<3xi32, #tpu.memory_space<smem>>, %arg2: memref<1xi32, #tpu.memory_space<smem>>, %arg3: memref<1xi32, #tpu.memory_space<smem>>) -> (i32, i32) {
    %c0_i32 = arith.constant 0 : i32
    %c0_i32_0 = arith.constant 0 : i32
    %c0_i32_1 = arith.constant 0 : i32
    return %c0_i32, %c0_i32_0 : i32, i32
  }
  func.func @transform_3(%arg0: i32, %arg1: memref<3xi32, #tpu.memory_space<smem>>, %arg2: memref<1xi32, #tpu.memory_space<smem>>, %arg3: memref<1xi32, #tpu.memory_space<smem>>) -> (i32, i32) {
    %c0_i32 = arith.constant 0 : i32
    %c0_i32_0 = arith.constant 0 : i32
    %c0_i32_1 = arith.constant 0 : i32
    return %c0_i32, %c0_i32_0 : i32, i32
  }
  func.func @transform_4(%arg0: i32, %arg1: memref<3xi32, #tpu.memory_space<smem>>, %arg2: memref<1xi32, #tpu.memory_space<smem>>, %arg3: memref<1xi32, #tpu.memory_space<smem>>) -> (i32, i32) {
    %c0_i32 = arith.constant 0 : i32
    %c0_i32_0 = arith.constant 0 : i32
    %c0_i32_1 = arith.constant 0 : i32
    return %c0_i32, %c0_i32_0 : i32, i32
  }
  func.func @transform_5(%arg0: i32, %arg1: memref<3xi32, #tpu.memory_space<smem>>, %arg2: memref<1xi32, #tpu.memory_space<smem>>, %arg3: memref<1xi32, #tpu.memory_space<smem>>) -> (i32, i32) {
    %c0_i32 = arith.constant 0 : i32
    %c0_i32_0 = arith.constant 0 : i32
    %c0_i32_1 = arith.constant 0 : i32
    return %c0_i32, %c0_i32_0 : i32, i32
  }
}

</mosaic_0001>

<llo_original>
// kernel: tpu_custom_call.1
$region0: #{tpu_custom_call.1}
  #allocation0 [shape = 'u32[]', space=smem, size = 0x4, offset = 0x4, fixed_abs, tag = 'smem constant byte address 0x4 - core index']
  #allocation1 [shape = 'u32[144,128]{1,0:T(1,128)}', space=vmem, size = 0x12000, scoped, tag = 'internal scratch']
  #allocation2 [shape = 'f32[8,32]{1,0:T(8,128)}', space=vmem, size = 0x1000, scoped, tag = 'scratch operand']
  #allocation3 [shape = 's32[1]{0}', space=sflag, size = 0x4, scoped, tag = 'scoped memory for tpu_custom_call.1']
  #allocation4 [shape = 'u8[512]{0}', space=smem, size = 0x200, scoped, tag = 'prefetched SMEM operand 0']
  #allocation5 [shape = 's32[1]{0:T(128)S(6)}', space=smem, size = 0x200, scoped, tag = 'prefetched SMEM operand 1']
  #allocation6 [shape = 's32[1]{0:T(128)S(6)}', space=smem, size = 0x200, scoped, tag = 'prefetched SMEM operand 2']
  %s0 = inlined_call_operand.vmem [shape: s32[3], index: 0, kind: input, shape index: {}]
  %s1 = inlined_call_operand.<no memory space> [shape: s32[1], index: 1, kind: input, shape index: {}]
  %s2 = inlined_call_operand.<no memory space> [shape: s32[1], index: 2, kind: input, shape index: {}]
  %s3 = inlined_call_operand.vmem [shape: f32[8,32], index: 3, kind: input, shape index: {}]
  %s4 = inlined_call_operand.hbm [shape: f32[32,128], index: 4, kind: input, shape index: {}]
  %s5 = inlined_call_operand.vmem [shape: f32[1,128], index: 5, kind: input, shape index: {}]
  %s6 = inlined_call_operand.hbm [shape: f32[128,128], index: 6, kind: input, shape index: {}]
  %s7 = inlined_call_operand.vmem [shape: f32[1,128], index: 7, kind: input, shape index: {}]
  %s8 = inlined_call_operand.hbm [shape: f32[8,128], index: 8, kind: output, shape index: {}]
  %s9 = sld [smem:[#allocation0]]
  $region53: #{tpu_custom_call.1} parent=0
    _
  %s11 = ssub.s32 1, %s9
  %s12 = scalar_select 0, %s11, %s9
  %s13 = sshll.u32 %s0, 4
  %s14 = int_to_ptr.vmem [resolvable:$true] %s13
  %16 = dma.vmem_to_smem %s14, 16, [#allocation4], [#allocation3]
  %17 = sst [smem:[#allocation5]] %s1
  %18 = sst [smem:[#allocation6]] %s2
  %19 = dma.done [#allocation3], 16
  %20 = sfence
  $region1: #{tpu_custom_call.1} parent=0
    #allocation7 [shape = 'u8[16384]{0}', space=vmem, size = 0x4000, scoped, tag = 'input window, operand 4, single buffered']
    #allocation8 [shape = 's32[1]{0}', space=sflag, size = 0x4, scoped, tag = 'scoped memory for tpu_custom_call.1']
    #allocation9 [shape = 's32[1]{0}', space=sflag, size = 0x4, scoped, tag = 'scoped memory for tpu_custom_call.1']
    #allocation10 [shape = 'u8[65536]{0}', space=vmem, size = 0x10000, scoped, tag = 'input window, operand 6, single buffered']
    #allocation11 [shape = 's32[1]{0}', space=sflag, size = 0x4, scoped, tag = 'scoped memory for tpu_custom_call.1']
    #allocation12 [shape = 'u8[4096]{0}', space=vmem, size = 0x1000, scoped, tag = 'output window, operand 0, single buffered']
    %21 = vsyncpa [#allocation8], 0
    %22 = vsyncpa [#allocation11], 0
    %23 = vsyncpa [#allocation9], 0
    // Predicated region
    $region2: #{tpu_custom_call.1} parent=1 // pred_check
      _
    $region3: #{tpu_custom_call.1} parent=1 // pred_check_branch
      %25 = sbr.rel (0) target = $region5
    $region4: #{tpu_custom_call.1} parent=1 // pred_region
      _
    $region5: #{tpu_custom_call.1} parent=1 // pred_fallthru
      _
    // Predicated region
    $region6: #{tpu_custom_call.1} parent=1 // pred_check
      _
    $region7: #{tpu_custom_call.1} parent=1 // pred_check_branch
      %27 = sbr.rel (0) target = $region9
    $region8: #{tpu_custom_call.1} parent=1 // pred_region
      %s29 = ssub.s32 512, 512
      %30 = vsyncadd [#allocation8], %s29
      %s31 = sshll.u32 [#allocation7], 4
      %s32 = int_to_ptr.vmem [resolvable:$true] %s31
      %37 = dma.hbm_to_vmem [thread:$0]  %s4, 512, %s32, [#allocation8], 128, 128, 8
    $region9: #{tpu_custom_call.1} parent=1 // pred_fallthru
      _
    // Predicated region
    $region10: #{tpu_custom_call.1} parent=1 // pred_check
      _
    $region11: #{tpu_custom_call.1} parent=1 // pred_check_branch
      %39 = sbr.rel (0) target = $region13
    $region12: #{tpu_custom_call.1} parent=1 // pred_region
      _
    $region13: #{tpu_custom_call.1} parent=1 // pred_fallthru
      _
    // Predicated region
    $region14: #{tpu_custom_call.1} parent=1 // pred_check
      _
    $region15: #{tpu_custom_call.1} parent=1 // pred_check_branch
      %41 = sbr.rel (0) target = $region17
    $region16: #{tpu_custom_call.1} parent=1 // pred_region
      %s43 = ssub.s32 2048, 2048
      %44 = vsyncadd [#allocation11], %s43
      %s45 = sshll.u32 [#allocation10], 4
      %s46 = int_to_ptr.vmem [resolvable:$true] %s45
      %51 = dma.hbm_to_vmem [thread:$0]  %s6, 2048, %s46, [#allocation11], 128, 128, 8
    $region17: #{tpu_custom_call.1} parent=1 // pred_fallthru
      _
    // Predicated region
    $region18: #{tpu_custom_call.1} parent=1 // pred_check
      _
    $region19: #{tpu_custom_call.1} parent=1 // pred_check_branch
      %53 = sbr.rel (0) target = $region21
    $region20: #{tpu_custom_call.1} parent=1 // pred_region
      _
    $region21: #{tpu_custom_call.1} parent=1 // pred_fallthru
      _
    // Predicated region
    $region22: #{tpu_custom_call.1} parent=1 // pred_check
      _
    $region23: #{tpu_custom_call.1} parent=1 // pred_check_branch
      %55 = sbr.rel (0) target = $region25
    $region24: #{tpu_custom_call.1} parent=1 // pred_region
      %56 = dma.done [#allocation8], 512
    $region25: #{tpu_custom_call.1} parent=1 // pred_fallthru
      _
    // Predicated region
    $region26: #{tpu_custom_call.1} parent=1 // pred_check
      _
    $region27: #{tpu_custom_call.1} parent=1 // pred_check_branch
      %58 = sbr.rel (0) target = $region29
    $region28: #{tpu_custom_call.1} parent=1 // pred_region
      %59 = dma.done [#allocation11], 2048
    $region29: #{tpu_custom_call.1} parent=1 // pred_fallthru
      _
    %p60 = scmp.eq.s32.totalorder 0, 0
    // Predicated region
    $region30: #{tpu_custom_call.1} parent=1 // pred_check
      %p61 = pneg %p60
    $region31: #{tpu_custom_call.1} parent=1 // pred_check_branch
      %63 = sbr.rel (%p61) target = $region33
    $region32: #{tpu_custom_call.1} parent=1 // pred_region
      %vm64 = vcmask 261120
      %65 = vst.msk [vmem:[#allocation2] sm:$0xff] %vm64, -3.4028235e+38
    $region33: #{tpu_custom_call.1} parent=1 // pred_fallthru
      _
    %v66 = vld [vmem:[%s3] sm:$0xff]
    %v67 = vlaneseq
    %v68 = vshrl.u32 %v67, 7
    %s69 = smul.u32 0, 8
    %s70 = sld [smem:[#allocation5]]
    %s71 = sld [smem:[#allocation6]]
    // While loop
    $region34: #{tpu_custom_call.1} parent=1 // loop_pre_header
      _
    $region35: #{tpu_custom_call.1} parent=1 // loop_header
      %s73 = sphi %s70, %s75
      %p74 = scmp.ge.s32.totalorder %s73, %s71
    $region36: #{tpu_custom_call.1} parent=1 // loop_header_branch
      %77 = sbr.rel (%p74) target = $region40
    $region37: #{tpu_custom_call.1} parent=1 // loop_body
      %s78 = sld [smem:[#allocation4 + %s73]]
      %s79 = ssub.s32 %s78, %s69
      %s80 = sadd.s32 %s73, 1
      %s81 = sld [smem:[#allocation4 + %s80]]
      %s82 = ssub.s32 %s81, %s69
      %v83 = vstv %s79
      %vm84 = vcmp.ge.s32.totalorder %v68, %v83
      %v85 = vstv %s82
      %vm86 = vcmp.lt.s32.totalorder %v68, %v85
      %vm87 = vmand %vm84, %vm86
      %v88 = vsel %vm87, 1, 0
      %vm89 = vcmp.eq.s32.totalorder %v88, 1
      %v90 = vsel %vm89, %v66, -3.4028235e+38
      %vm91 = vcmask 261120
      %v92 = vsel %vm91, %v90, -inf
      %v93 = vrot.slane %v92, 4
      %v94 = vmax.f32 %v92, %v93
      %v95 = vrot.slane %v94, 2
      %v96 = vmax.f32 %v94, %v95
      %v97 = vrot.slane %v96, 1
      %v98 = vmax.f32 %v96, %v97
      %s99 = scalar_lea.vmem [#allocation2], %s73
      %v100 = vld [vmem:[%s99] sm:$0x1]
      %v101 = vmax.f32 %v100, %v98
      %vm102 = vcmask 253952
      %103 = vst.msk [vmem:[%s99] sm:$0x1] %vm102, %v101
    $region38: #{tpu_custom_call.1} parent=1 // loop_footer
      %s75 = sadd.s32 %s73, 1
    $region39: #{tpu_custom_call.1} parent=1 // loop_footer_branch
      %72 = sbr.rel target = $region35
    $region40: #{tpu_custom_call.1} parent=1 // loop_exit
      _
    // Predicated region
    $region41: #{tpu_custom_call.1} parent=1 // pred_check
      %p104 = pneg %p60
    $region42: #{tpu_custom_call.1} parent=1 // pred_check_branch
      %106 = sbr.rel (%p104) target = $region44
    $region43: #{tpu_custom_call.1} parent=1 // pred_region
      %v107 = vld [vmem:[#allocation2] sm:$0xff]
      %v108 = vld [vmem:[#allocation7] sm:$0xff]
      %v109 = vld [vmem:[#allocation7 + $0x8] sm:$0xff]
      %v110 = vld [vmem:[#allocation7 + $0x10] sm:$0xff]
      %v111 = vld [vmem:[#allocation7 + $0x18] sm:$0xff]
      %v112 = vld [vmem:[%s5] sm:$0x1]
      %v114 = vlaneseq
      %v115 = vshrl.u32 %v114, 7
      %v116 = vsub.s32 0, %v115
      %v117 = vrot.slane %v112, %v116
      %vm119 = vcmask 261120
      %v121 = vsel %vm119, %v107, 0
      %123 = vmatprep.subr.mxu0 0.0
      %124 = vmatpush1.msra.mxu0 %v108
      %125 = vmatprep.subr.mxu0 0.0
      %126 = vmatpush1.msra.mxu0 %v109
      %127 = vmatprep.subr.mxu0 0.0
      %128 = vmatpush1.msra.mxu0 %v110
      %129 = vmatprep.subr.mxu0 0.0
      %130 = vmatpush1.msra.mxu0 %v111
      %131 = vmatprep.subr.mxu0 0.0
      %132 = vmatpush1.msra.mxu0 0.0
      %133 = vmatprep.subr.mxu0 0.0
      %134 = vmatpush1.msra.mxu0 0.0
      %135 = vmatprep.subr.mxu0 0.0
      %136 = vmatpush1.msra.mxu0 0.0
      %137 = vmatprep.subr.mxu0 0.0
      %138 = vmatpush1.msra.mxu0 0.0
      %139 = vmatprep.subr.mxu0 0.0
      %140 = vmatpush1.msra.mxu0 0.0
      %141 = vmatprep.subr.mxu0 0.0
      %142 = vmatpush1.msra.mxu0 0.0
      %143 = vmatprep.subr.mxu0 0.0
      %144 = vmatpush1.msra.mxu0 0.0
      %145 = vmatprep.subr.mxu0 0.0
      %146 = vmatpush1.msra.mxu0 0.0
      %147 = vmatprep.subr.mxu0 0.0
      %148 = vmatpush1.msra.mxu0 0.0
      %149 = vmatprep.subr.mxu0 0.0
      %150 = vmatpush1.msra.mxu0 0.0
      %151 = vmatprep.subr.mxu0 0.0
      %152 = vmatpush1.msra.mxu0 0.0
      %153 = vmatprep.subr.mxu0 0.0
      %154 = vmatpush1.msra.mxu0 0.0
      %155 = vmatprep.subr.mxu0 0.0
      %156 = vmatpush1.msra.mxu0 0.0
      %157 = vmatprep.subr.mxu0 0.0
      %158 = vmatpush1.msra.mxu0 0.0
      %159 = vmatprep.subr.mxu0 0.0
      %160 = vmatpush1.msra.mxu0 0.0
      %161 = vmatprep.subr.mxu0 0.0
      %162 = vmatpush1.msra.mxu0 0.0
      %163 = vmatprep.subr.mxu0 0.0
      %164 = vmatpush1.msra.mxu0 0.0
      %165 = vmatprep.subr.mxu0 0.0
      %166 = vmatpush1.msra.mxu0 0.0
      %167 = vmatprep.subr.mxu0 0.0
      %168 = vmatpush1.msra.mxu0 0.0
      %169 = vmatprep.subr.mxu0 0.0
      %170 = vmatpush1.msra.mxu0 0.0
      %171 = vmatprep.subr.mxu0 0.0
      %172 = vmatpush1.msra.mxu0 0.0
      %173 = vmatprep.subr.mxu0 0.0
      %174 = vmatpush1.msra.mxu0 0.0
      %175 = vmatprep.subr.mxu0 0.0
      %176 = vmatpush1.msra.mxu0 0.0
      %177 = vmatprep.subr.mxu0 0.0
      %178 = vmatpush1.msra.mxu0 0.0
      %179 = vmatprep.subr.mxu0 0.0
      %180 = vmatpush1.msra.mxu0 0.0
      %181 = vmatprep.subr.mxu0 0.0
      %182 = vmatpush1.msra.mxu0 0.0
      %183 = vmatprep.subr.mxu0 0.0
      %184 = vmatpush1.msra.mxu0 0.0
      %185 = vmatprep.subr.mxu0 0.0
      %186 = vmatpush1.msra.mxu0 0.0
      %187 = vmatprep.mubr.f32.mxu0 0.0
      %188 = vmatmul.mubr.f32.gmra.mrb[0].mxu0 %v121
      %v189 = vpop.f32.mrb[0].mxu0
      %v190 = vadd.f32 %v117, %v189
      %v191 = vpop.f32.mrb[0].mxu0
      %192 = vdwg.mxu0
      %v193 = vmax.f32 %v190, 0.0
      %v194 = vld [vmem:[#allocation10] sm:$0xff]
      %v195 = vld [vmem:[#allocation10 + $0x8] sm:$0xff]
      %v196 = vld [vmem:[#allocation10 + $0x10] sm:$0xff]
      %v197 = vld [vmem:[#allocation10 + $0x18] sm:$0xff]
      %v198 = vld [vmem:[#allocation10 + $0x20] sm:$0xff]
      %v199 = vld [vmem:[#allocation10 + $0x28] sm:$0xff]
      %v200 = vld [vmem:[#allocation10 + $0x30] sm:$0xff]
      %v201 = vld [vmem:[#allocation10 + $0x38] sm:$0xff]
      %v202 = vld [vmem:[#allocation10 + $0x40] sm:$0xff]
      %v203 = vld [vmem:[#allocation10 + $0x48] sm:$0xff]
      %v204 = vld [vmem:[#allocation10 + $0x50] sm:$0xff]
      %v205 = vld [vmem:[#allocation10 + $0x58] sm:$0xff]
      %v206 = vld [vmem:[#allocation10 + $0x60] sm:$0xff]
      %v207 = vld [vmem:[#allocation10 + $0x68] sm:$0xff]
      %v208 = vld [vmem:[#allocation10 + $0x70] sm:$0xff]
      %v209 = vld [vmem:[#allocation10 + $0x78] sm:$0xff]
      %v210 = vld [vmem:[%s7] sm:$0x1]
      %v212 = vlaneseq
      %v213 = vshrl.u32 %v212, 7
      %v214 = vsub.s32 0, %v213
      %v215 = vrot.slane %v210, %v214
      %217 = vmatprep.subr.mxu0 0.0
      %218 = vmatpush1.msra.mxu0 %v194
      %219 = vmatprep.subr.mxu0 0.0
      %220 = vmatpush1.msra.mxu0 %v195
      %221 = vmatprep.subr.mxu0 0.0
      %222 = vmatpush1.msra.mxu0 %v196
      %223 = vmatprep.subr.mxu0 0.0
      %224 = vmatpush1.msra.mxu0 %v197
      %225 = vmatprep.subr.mxu0 0.0
      %226 = vmatpush1.msra.mxu0 %v198
      %227 = vmatprep.subr.mxu0 0.0
      %228 = vmatpush1.msra.mxu0 %v199
      %229 = vmatprep.subr.mxu0 0.0
      %230 = vmatpush1.msra.mxu0 %v200
      %231 = vmatprep.subr.mxu0 0.0
      %232 = vmatpush1.msra.mxu0 %v201
      %233 = vmatprep.subr.mxu0 0.0
      %234 = vmatpush1.msra.mxu0 %v202
      %235 = vmatprep.subr.mxu0 0.0
      %236 = vmatpush1.msra.mxu0 %v203
      %237 = vmatprep.subr.mxu0 0.0
      %238 = vmatpush1.msra.mxu0 %v204
      %239 = vmatprep.subr.mxu0 0.0
      %240 = vmatpush1.msra.mxu0 %v205
      %241 = vmatprep.subr.mxu0 0.0
      %242 = vmatpush1.msra.mxu0 %v206
      %243 = vmatprep.subr.mxu0 0.0
      %244 = vmatpush1.msra.mxu0 %v207
      %245 = vmatprep.subr.mxu0 0.0
      %246 = vmatpush1.msra.mxu0 %v208
      %247 = vmatprep.subr.mxu0 0.0
      %248 = vmatpush1.msra.mxu0 %v209
      %249 = vmatprep.subr.mxu0 0.0
      %250 = vmatpush1.msra.mxu0 0.0
      %251 = vmatprep.subr.mxu0 0.0
      %252 = vmatpush1.msra.mxu0 0.0
      %253 = vmatprep.subr.mxu0 0.0
      %254 = vmatpush1.msra.mxu0 0.0
      %255 = vmatprep.subr.mxu0 0.0
      %256 = vmatpush1.msra.mxu0 0.0
      %257 = vmatprep.subr.mxu0 0.0
      %258 = vmatpush1.msra.mxu0 0.0
      %259 = vmatprep.subr.mxu0 0.0
      %260 = vmatpush1.msra.mxu0 0.0
      %261 = vmatprep.subr.mxu0 0.0
      %262 = vmatpush1.msra.mxu0 0.0
      %263 = vmatprep.subr.mxu0 0.0
      %264 = vmatpush1.msra.mxu0 0.0
      %265 = vmatprep.subr.mxu0 0.0
      %266 = vmatpush1.msra.mxu0 0.0
      %267 = vmatprep.subr.mxu0 0.0
      %268 = vmatpush1.msra.mxu0 0.0
      %269 = vmatprep.subr.mxu0 0.0
      %270 = vmatpush1.msra.mxu0 0.0
      %271 = vmatprep.subr.mxu0 0.0
      %272 = vmatpush1.msra.mxu0 0.0
      %273 = vmatprep.subr.mxu0 0.0
      %274 = vmatpush1.msra.mxu0 0.0
      %275 = vmatprep.subr.mxu0 0.0
      %276 = vmatpush1.msra.mxu0 0.0
      %277 = vmatprep.subr.mxu0 0.0
      %278 = vmatpush1.msra.mxu0 0.0
      %279 = vmatprep.subr.mxu0 0.0
      %280 = vmatpush1.msra.mxu0 0.0
      %281 = vmatprep.mubr.f32.mxu0 0.0
      %282 = vmatmul.mubr.f32.gmra.mrb[0].mxu0 %v193
      %v283 = vpop.f32.mrb[0].mxu0
      %v284 = vadd.f32 %v215, %v283
      %v285 = vpop.f32.mrb[0].mxu0
      %286 = vdwg.mxu0
      %v287 = vmax.f32 %v284, 0.0
      %288 = vst [vmem:[#allocation12] sm:$0xff] %v287
    $region44: #{tpu_custom_call.1} parent=1 // pred_fallthru
      _
    // Predicated region
    $region45: #{tpu_custom_call.1} parent=1 // pred_check
      _
    $region46: #{tpu_custom_call.1} parent=1 // pred_check_branch
      %290 = sbr.rel (0) target = $region48
    $region47: #{tpu_custom_call.1} parent=1 // pred_region
      %s292 = ssub.s32 128, 128
      %293 = vsyncadd [#allocation9], %s292
      %s295 = sshll.u32 [#allocation12], 4
      %s296 = int_to_ptr.vmem [resolvable:$true] %s295
      %298 = dma.vmem_to_hbm [thread:$0]  %s296, 128, %s8, [#allocation9]
    $region48: #{tpu_custom_call.1} parent=1 // pred_fallthru
      _
    // Predicated region
    $region49: #{tpu_custom_call.1} parent=1 // pred_check
      _
    $region50: #{tpu_custom_call.1} parent=1 // pred_check_branch
      %300 = sbr.rel (0) target = $region52
    $region51: #{tpu_custom_call.1} parent=1 // pred_region
      %301 = dma.done [#allocation9], 128
    $region52: #{tpu_custom_call.1} parent=1 // pred_fallthru
      _
    %302 = vsyncpa [#allocation8], 1
    %303 = vsyncpa [#allocation11], 1
    %304 = vsyncpa [#allocation9], 1

</llo_original>
